<compile_context>
chip_gen: v6e
topology: v6e:2x2x1
jax: 0.10.0
libtpu: 0.0.40
codegen_flags: <defaults>
</compile_context>

<pallas_src>
import jax
import jax.numpy as jnp
from jax.experimental import pallas as pl
from jax.experimental.pallas import tpu as pltpu


def _full_semantic_kernel(text_ref, inv_len_ref, lin_w_ref, lin_b_ref,
                          dense_w_ref, dense_b_ref, out_ref):
    S = text_ref.shape[1]              # full sequence length (static)

    # ---- pool before projecting (exact identity) --------------------------------------
    #   sum_s (x_s @ W + b) / len = ((sum_s x_s) @ W) / len + (S * b) / len
    pooled = jnp.sum(text_ref[...].astype(jnp.float32), axis=1)            # (bt, E)

    # ---- tiny projection on the MXU with f32 accumulation -----------------------------
    proj = jnp.dot(pooled, lin_w_ref[...].astype(jnp.float32),
                   preferred_element_type=jnp.float32)                     # (bt, H)

    inv_len = inv_len_ref[...]                                             # (bt, 1)
    hc_mean = (proj + S * lin_b_ref[...]) * inv_len                        # (bt, H)

    # ---- classification head: out = hc_mean @ W_dense + b_dense -----------------------
    out = jnp.dot(hc_mean, dense_w_ref[...].astype(jnp.float32),
                  preferred_element_type=jnp.float32) + dense_b_ref[...]   # (bt, L)
    out_ref[...] = out.astype(out_ref.dtype)


def _pick_b_tile(B, S, E, itemsize, target_bytes=4 << 20):
    """Largest batch tile whose text block fits ~target_bytes per pipeline buffer.

    Candidates must divide B and be either B itself or a multiple of 8 (so the
    (b_tile, ...) BlockSpecs satisfy the (8, 128) tiling rule).  Prefers >= 2 grid
    steps so the pipeline overlaps DMA with compute and both v7x TensorCores get work.
    """
    row_bytes = S * E * itemsize
    candidates = [d for d in range(1, B + 1)
                  if B % d == 0 and (d == B or d % 8 == 0)]
    fitting = [d for d in candidates if d * row_bytes <= target_bytes]
    multi = [d for d in fitting if d < B]          # >= 2 grid steps preferred
    if multi:
        return max(multi)
    if fitting:
        return max(fitting)
    return min(candidates)


def full_semantic_no_mha(text, context_masks, lin_w, lin_b, dense_w, dense_b,
                         *, b_tile=None):
    """Pallas forward of FullSemantic_no_MHA (post-encoder part).

    text          : (B, S, E) float32/bfloat16 -- output of the (untranslated) encoder
    context_masks : (B, S)    int/float -- 1 for context tokens, 0 for padding
    lin_w, lin_b  : (E, H), (H,)  -- the `lin` projection (embed_dim != hidden_dim case)
    dense_w, dense_b : (H, L), (L,) -- classification head
    returns       : (B, L) float32 logits
    """
    B, S, E = text.shape
    H = lin_w.shape[1]
    L = dense_w.shape[1]

    if b_tile is None:
        b_tile = _pick_b_tile(B, S, E, jnp.dtype(text.dtype).itemsize)
    assert B % b_tile == 0 and (b_tile == B or b_tile % 8 == 0)
    grid = (B // b_tile,)

    # Precompute 1/emb_len once in the wrapper: the (B, S) mask never touches HBM->VMEM
    # inside the kernel and no in-kernel lane reduction / reciprocal is needed.
    emb_len = jnp.sum(context_masks, axis=-1).astype(jnp.float32)           # (B,)
    inv_len = (1.0 / emb_len).reshape(B, 1)                                 # (B, 1)

    lin_b2 = lin_b.reshape(1, H).astype(jnp.float32)
    dense_b2 = dense_b.reshape(1, L).astype(jnp.float32)

    grid_spec = pltpu.PrefetchScalarGridSpec(
        num_scalar_prefetch=0,
        grid=grid,
        in_specs=[
            pl.BlockSpec((b_tile, S, E), lambda i: (i, 0, 0)),   # text (dominant stream)
            pl.BlockSpec((b_tile, 1),    lambda i: (i, 0)),      # 1 / emb_len
            pl.BlockSpec((E, H),         lambda i: (0, 0)),      # lin weight
            pl.BlockSpec((1, H),         lambda i: (0, 0)),      # lin bias
            pl.BlockSpec((H, L),         lambda i: (0, 0)),      # dense weight
            pl.BlockSpec((1, L),         lambda i: (0, 0)),      # dense bias
        ],
        out_specs=pl.BlockSpec((b_tile, L), lambda i: (i, 0)),
    )

    return pl.pallas_call(
        _full_semantic_kernel,
        out_shape=jax.ShapeDtypeStruct((B, L), jnp.float32),
        grid_spec=grid_spec,
        compiler_params=pltpu.CompilerParams(
            dimension_semantics=("parallel",),    # independent batch tiles (v7x: 2 TCs)
        ),
    )(text, inv_len, lin_w, lin_b2, dense_w, dense_b2)


def full_semantic_no_mha_ref(text, context_masks, lin_w, lin_b, dense_w, dense_b):
    """Pure-JAX reference mirroring the PyTorch forward exactly (project -> pool)."""
    emb_len = jnp.sum(context_masks, axis=-1).astype(jnp.float32)        # (B,)
    text_out = jnp.matmul(text, lin_w) + lin_b                           # (B, S, H)
    hc_mean = jnp.sum(text_out, axis=1) / emb_len[:, None]               # (B, H)
    return jnp.matmul(hc_mean, dense_w) + dense_b                        # (B, L)


if __name__ == "__main__":
    B, S = 2, 8
    embed_dim, hidden_dim, num_label = 32, 64, 3

    key = jax.random.PRNGKey(0)
    k_text, k_lw, k_lb, k_dw, k_db = jax.random.split(key, 5)

    # stand-in for the pretrained encoder's output embeddings (see TODO above)
    text = jax.random.normal(k_text, (B, S, embed_dim), dtype=jnp.float32)

    # context masks: first `length` tokens are context, the rest padding
    lengths = jnp.array([5, 8], dtype=jnp.int32)
    context_masks = (jnp.arange(S)[None, :] < lengths[:, None]).astype(jnp.int32)  # (B, S)

    lin_w = 0.1 * jax.random.normal(k_lw, (embed_dim, hidden_dim), dtype=jnp.float32)
    lin_b = 0.1 * jax.random.normal(k_lb, (hidden_dim,), dtype=jnp.float32)
    dense_w = 0.1 * jax.random.normal(k_dw, (hidden_dim, num_label), dtype=jnp.float32)
    dense_b = 0.1 * jax.random.normal(k_db, (num_label,), dtype=jnp.float32)

    out = full_semantic_no_mha(text, context_masks, lin_w, lin_b, dense_w, dense_b)
    out = jax.block_until_ready(out)

    ref = full_semantic_no_mha_ref(text, context_masks, lin_w, lin_b, dense_w, dense_b)
    assert out.shape == (B, num_label)
    assert jnp.allclose(out, ref, atol=1e-5, rtol=1e-5)

    print("KERNEL_OK")
</pallas_src>

<mosaic_0001>
module attributes {stable_mosaic.version = 11 : i64} {
  func.func @_full_semantic_kernel(%arg0: i32, %arg1: memref<2x8x32xf32, #tpu.memory_space<vmem>>, %arg2: memref<2x1xf32, #tpu.memory_space<vmem>>, %arg3: memref<32x64xf32, #tpu.memory_space<vmem>>, %arg4: memref<1x64xf32, #tpu.memory_space<vmem>>, %arg5: memref<64x3xf32, #tpu.memory_space<vmem>>, %arg6: memref<1x3xf32, #tpu.memory_space<vmem>>, %arg7: memref<2x3xf32, #tpu.memory_space<vmem>>) attributes {dimension_semantics = [#tpu.dimension_semantics<parallel>], iteration_bounds = array<i64: 1>, scalar_prefetch = 0 : i64, scratch_operands = 0 : i64, tpu.core_type = #tpu.core_type<tc>, window_params = [{transform_indices = @transform_0, window_bounds = array<i64: 2, 8, 32>}, {transform_indices = @transform_1, window_bounds = array<i64: 2, 1>}, {pipeline_mode = #tpu.pipeline_mode<synchronous>, transform_indices = @transform_2, window_bounds = array<i64: 32, 64>}, {pipeline_mode = #tpu.pipeline_mode<synchronous>, transform_indices = @transform_3, window_bounds = array<i64: 1, 64>}, {pipeline_mode = #tpu.pipeline_mode<synchronous>, transform_indices = @transform_4, window_bounds = array<i64: 64, 3>}, {pipeline_mode = #tpu.pipeline_mode<synchronous>, transform_indices = @transform_5, window_bounds = array<i64: 1, 3>}, {transform_indices = @transform_6, window_bounds = array<i64: 2, 3>}]} {
    %c0 = arith.constant 0 : index
    %c0_0 = arith.constant 0 : index
    %c0_1 = arith.constant 0 : index
    %0 = vector.load %arg1[%c0, %c0_0, %c0_1] : memref<2x8x32xf32, #tpu.memory_space<vmem>>, vector<2x8x32xf32>
    %cst = arith.constant dense<0.000000e+00> : vector<2x32xf32>
    %1 = vector.multi_reduction <add>, %0, %cst [1] : vector<2x8x32xf32> to vector<2x32xf32>
    %c0_2 = arith.constant 0 : index
    %c0_3 = arith.constant 0 : index
    %2 = vector.load %arg3[%c0_2, %c0_3] : memref<32x64xf32, #tpu.memory_space<vmem>>, vector<32x64xf32>
    %cst_4 = arith.constant dense<0.000000e+00> : vector<2x64xf32>
    %3 = tpu.matmul %1, %2, %cst_4 {dimension_numbers = #tpu.dot_dimension_numbers<[1], [0], [0], [1], [0, 0, 1, 1], [], []>} : vector<2x32xf32>, vector<32x64xf32>, vector<2x64xf32> -> vector<2x64xf32>
    %c0_5 = arith.constant 0 : index
    %c0_6 = arith.constant 0 : index
    %4 = vector.load %arg2[%c0_5, %c0_6] : memref<2x1xf32, #tpu.memory_space<vmem>>, vector<2x1xf32>
    %c0_7 = arith.constant 0 : index
    %c0_8 = arith.constant 0 : index
    %5 = vector.load %arg4[%c0_7, %c0_8] : memref<1x64xf32, #tpu.memory_space<vmem>>, vector<1x64xf32>
    %cst_9 = arith.constant 8.000000e+00 : f32
    %6 = vector.broadcast %cst_9 : f32 to vector<1x64xf32>
    %7 = arith.mulf %6, %5 : vector<1x64xf32>
    %8 = vector.broadcast %7 : vector<1x64xf32> to vector<2x64xf32>
    %9 = arith.addf %3, %8 : vector<2x64xf32>
    %10 = vector.broadcast %4 : vector<2x1xf32> to vector<2x64xf32>
    %11 = arith.mulf %9, %10 : vector<2x64xf32>
    %c0_10 = arith.constant 0 : index
    %c0_11 = arith.constant 0 : index
    %12 = vector.load %arg5[%c0_10, %c0_11] : memref<64x3xf32, #tpu.memory_space<vmem>>, vector<64x3xf32>
    %cst_12 = arith.constant dense<0.000000e+00> : vector<2x3xf32>
    %13 = tpu.matmul %11, %12, %cst_12 {dimension_numbers = #tpu.dot_dimension_numbers<[1], [0], [0], [1], [0, 0, 1, 1], [], []>} : vector<2x64xf32>, vector<64x3xf32>, vector<2x3xf32> -> vector<2x3xf32>
    %c0_13 = arith.constant 0 : index
    %c0_14 = arith.constant 0 : index
    %14 = vector.load %arg6[%c0_13, %c0_14] : memref<1x3xf32, #tpu.memory_space<vmem>>, vector<1x3xf32>
    %15 = vector.broadcast %14 : vector<1x3xf32> to vector<2x3xf32>
    %16 = arith.addf %13, %15 : vector<2x3xf32>
    %c0_15 = arith.constant 0 : index
    %c0_16 = arith.constant 0 : index
    %17 = vector.load %arg7[%c0_15, %c0_16] : memref<2x3xf32, #tpu.memory_space<vmem>>, vector<2x3xf32>
    tpu.vector_store %arg7[%c0_15, %c0_16], %16 {strides = array<i32>} : memref<2x3xf32, #tpu.memory_space<vmem>>, vector<2x3xf32>,
    return
  }
  func.func @transform_0(%arg0: i32) -> (i32, i32, i32) {
    %c0_i32 = arith.constant 0 : i32
    %c0_i32_0 = arith.constant 0 : i32
    %c0_i32_1 = arith.constant 0 : i32
    return %arg0, %c0_i32, %c0_i32_0 : i32, i32, i32
  }
  func.func @transform_1(%arg0: i32) -> (i32, i32) {
    %c0_i32 = arith.constant 0 : i32
    %c0_i32_0 = arith.constant 0 : i32
    return %arg0, %c0_i32 : i32, i32
  }
  func.func @transform_2(%arg0: i32) -> (i32, i32) {
    %c0_i32 = arith.constant 0 : i32
    %c0_i32_0 = arith.constant 0 : i32
    %c0_i32_1 = arith.constant 0 : i32
    return %c0_i32, %c0_i32_0 : i32, i32
  }
  func.func @transform_3(%arg0: i32) -> (i32, i32) {
    %c0_i32 = arith.constant 0 : i32
    %c0_i32_0 = arith.constant 0 : i32
    %c0_i32_1 = arith.constant 0 : i32
    return %c0_i32, %c0_i32_0 : i32, i32
  }
  func.func @transform_4(%arg0: i32) -> (i32, i32) {
    %c0_i32 = arith.constant 0 : i32
    %c0_i32_0 = arith.constant 0 : i32
    %c0_i32_1 = arith.constant 0 : i32
    return %c0_i32, %c0_i32_0 : i32, i32
  }
  func.func @transform_5(%arg0: i32) -> (i32, i32) {
    %c0_i32 = arith.constant 0 : i32
    %c0_i32_0 = arith.constant 0 : i32
    %c0_i32_1 = arith.constant 0 : i32
    return %c0_i32, %c0_i32_0 : i32, i32
  }
  func.func @transform_6(%arg0: i32) -> (i32, i32) {
    %c0_i32 = arith.constant 0 : i32
    %c0_i32_0 = arith.constant 0 : i32
    return %arg0, %c0_i32 : i32, i32
  }
}

</mosaic_0001>

<llo_original>
// kernel: tpu_custom_call.1
$region0: #{tpu_custom_call.1}
  #allocation0 [shape = 'u32[]', space=smem, size = 0x4, offset = 0x4, fixed_abs, tag = 'smem constant byte address 0x4 - core index']
  #allocation1 [shape = 'u32[144,128]{1,0:T(1,128)}', space=vmem, size = 0x12000, scoped, tag = 'internal scratch']
  %s0 = inlined_call_operand.vmem [shape: f32[2,8,32], index: 0, kind: input, shape index: {}]
  %s1 = inlined_call_operand.vmem [shape: f32[2,1], index: 1, kind: input, shape index: {}]
  %s2 = inlined_call_operand.vmem [shape: f32[32,64], index: 2, kind: input, shape index: {}]
  %s3 = inlined_call_operand.vmem [shape: f32[1,64], index: 3, kind: input, shape index: {}]
  %s4 = inlined_call_operand.vmem [shape: f32[64,3], index: 4, kind: input, shape index: {}]
  %s5 = inlined_call_operand.vmem [shape: f32[1,3], index: 5, kind: input, shape index: {}]
  %s6 = inlined_call_operand.hbm [shape: f32[2,3], index: 6, kind: output, shape index: {}]
  %s7 = sld [smem:[#allocation0]]
  $region34: #{tpu_custom_call.1} parent=0
    _
  %s9 = ssub.s32 1, %s7
  %s10 = scalar_select 0, %s9, %s7
  $region1: #{tpu_custom_call.1} parent=0
    #allocation2 [shape = 'u8[1024]{0}', space=vmem, size = 0x400, scoped, tag = 'output window, operand 0, single buffered']
    #allocation3 [shape = 's32[1]{0}', space=sflag, size = 0x4, scoped, tag = 'scoped memory for tpu_custom_call.1']
    %11 = vsyncpa [#allocation3], 0
    // Predicated region
    $region2: #{tpu_custom_call.1} parent=1 // pred_check
      _
    $region3: #{tpu_custom_call.1} parent=1 // pred_check_branch
      %13 = sbr.rel (0) target = $region5
    $region4: #{tpu_custom_call.1} parent=1 // pred_region
      _
    $region5: #{tpu_custom_call.1} parent=1 // pred_fallthru
      _
    // Predicated region
    $region6: #{tpu_custom_call.1} parent=1 // pred_check
      _
    $region7: #{tpu_custom_call.1} parent=1 // pred_check_branch
      %15 = sbr.rel (0) target = $region9
    $region8: #{tpu_custom_call.1} parent=1 // pred_region
      _
    $region9: #{tpu_custom_call.1} parent=1 // pred_fallthru
      _
    // Predicated region
    $region10: #{tpu_custom_call.1} parent=1 // pred_check
      _
    $region11: #{tpu_custom_call.1} parent=1 // pred_check_branch
      %17 = sbr.rel (0) target = $region13
    $region12: #{tpu_custom_call.1} parent=1 // pred_region
      _
    $region13: #{tpu_custom_call.1} parent=1 // pred_fallthru
      _
    // Predicated region
    $region14: #{tpu_custom_call.1} parent=1 // pred_check
      _
    $region15: #{tpu_custom_call.1} parent=1 // pred_check_branch
      %19 = sbr.rel (0) target = $region17
    $region16: #{tpu_custom_call.1} parent=1 // pred_region
      _
    $region17: #{tpu_custom_call.1} parent=1 // pred_fallthru
      _
    // Predicated region
    $region18: #{tpu_custom_call.1} parent=1 // pred_check
      _
    $region19: #{tpu_custom_call.1} parent=1 // pred_check_branch
      %21 = sbr.rel (0) target = $region21
    $region20: #{tpu_custom_call.1} parent=1 // pred_region
      _
    $region21: #{tpu_custom_call.1} parent=1 // pred_fallthru
      _
    // Predicated region
    $region22: #{tpu_custom_call.1} parent=1 // pred_check
      _
    $region23: #{tpu_custom_call.1} parent=1 // pred_check_branch
      %23 = sbr.rel (0) target = $region25
    $region24: #{tpu_custom_call.1} parent=1 // pred_region
      _
    $region25: #{tpu_custom_call.1} parent=1 // pred_fallthru
      _
    %v24 = vld [vmem:[%s0] sm:$0xff]
    %v25 = vld [vmem:[%s0 + $0x8] sm:$0xff]
    %vm26 = vcmask 261120
    %v27 = vsel %vm26, %v24, 0.0
    %v28 = vrot.slane %v27, 4
    %v29 = vadd.f32 %v27, %v28
    %v30 = vrot.slane %v29, 2
    %v31 = vadd.f32 %v29, %v30
    %v32 = vrot.slane %v31, 1
    %v33 = vadd.f32 %v31, %v32
    %v34 = vsel %vm26, %v25, 0.0
    %v35 = vrot.slane %v34, 4
    %v36 = vadd.f32 %v34, %v35
    %v37 = vrot.slane %v36, 2
    %v38 = vadd.f32 %v36, %v37
    %v39 = vrot.slane %v38, 1
    %v40 = vadd.f32 %v38, %v39
    %v41 = vld [vmem:[%s2] sm:$0xff]
    %v42 = vld [vmem:[%s2 + $0x8] sm:$0xff]
    %v43 = vld [vmem:[%s2 + $0x10] sm:$0xff]
    %v44 = vld [vmem:[%s2 + $0x18] sm:$0xff]
    %v45 = vld [vmem:[%s1] sm:$0x3]
    %v46 = vld [vmem:[%s3] sm:$0x1]
    %v47 = vmul.f32 %v46, 8.0
    %v49 = vlaneseq
    %v50 = vshrl.u32 %v49, 7
    %v51 = vsub.s32 0, %v50
    %v52 = vrot.slane %v47, %v51
    %vm56 = vcmask 1041409
    %v57 = vsel %vm56, %v40, %v33
    %v58 = vsel %vm26, %v57, 0
    %60 = vmatprep.subr.mxu0 0.0
    %61 = vmatpush1.msra.mxu0 0.0
    %62 = vmatprep.subr.mxu0 0.0
    %63 = vmatpush1.msra.mxu0 0.0
    %64 = vmatprep.subr.mxu0 0.0
    %65 = vmatpush1.msra.mxu0 0.0
    %66 = vmatprep.subr.mxu0 0.0
    %67 = vmatpush1.msra.mxu0 0.0
    %68 = vmatprep.subr.mxu0 0.0
    %69 = vmatpush1.msra.mxu0 0.0
    %70 = vmatprep.subr.mxu0 0.0
    %71 = vmatpush1.msra.mxu0 0.0
    %72 = vmatprep.subr.mxu0 0.0
    %73 = vmatpush1.msra.mxu0 0.0
    %74 = vmatprep.subr.mxu0 0.0
    %75 = vmatpush1.msra.mxu0 0.0
    %76 = vmatprep.subr.mxu0 0.0
    %77 = vmatpush1.msra.mxu0 0.0
    %78 = vmatprep.subr.mxu0 0.0
    %79 = vmatpush1.msra.mxu0 0.0
    %80 = vmatprep.subr.mxu0 0.0
    %81 = vmatpush1.msra.mxu0 0.0
    %82 = vmatprep.subr.mxu0 0.0
    %83 = vmatpush1.msra.mxu0 0.0
    %84 = vmatprep.subr.mxu0 0.0
    %85 = vmatpush1.msra.mxu0 %v44
    %86 = vmatprep.subr.mxu0 0.0
    %87 = vmatpush1.msra.mxu0 %v43
    %88 = vmatprep.subr.mxu0 0.0
    %89 = vmatpush1.msra.mxu0 %v42
    %90 = vmatprep.subr.mxu0 0.0
    %91 = vmatpush1.msra.mxu0 %v41
    %92 = vmatprep.subr.mxu0 0.0
    %93 = vmatpush2.msra.mxu0 0.0
    %94 = vmatprep.subr.mxu0 0.0
    %95 = vmatpush2.msra.mxu0 0.0
    %96 = vmatprep.subr.mxu0 0.0
    %97 = vmatpush2.msra.mxu0 0.0
    %98 = vmatprep.subr.mxu0 0.0
    %99 = vmatpush2.msra.mxu0 0.0
    %100 = vmatprep.subr.mxu0 0.0
    %101 = vmatpush2.msra.mxu0 0.0
    %102 = vmatprep.subr.mxu0 0.0
    %103 = vmatpush2.msra.mxu0 0.0
    %104 = vmatprep.subr.mxu0 0.0
    %105 = vmatpush2.msra.mxu0 0.0
    %106 = vmatprep.subr.mxu0 0.0
    %107 = vmatpush2.msra.mxu0 0.0
    %108 = vmatprep.subr.mxu0 0.0
    %109 = vmatpush2.msra.mxu0 0.0
    %110 = vmatprep.subr.mxu0 0.0
    %111 = vmatpush2.msra.mxu0 0.0
    %112 = vmatprep.subr.mxu0 0.0
    %113 = vmatpush2.msra.mxu0 0.0
    %114 = vmatprep.subr.mxu0 0.0
    %115 = vmatpush2.msra.mxu0 0.0
    %116 = vmatprep.subr.mxu0 0.0
    %117 = vmatpush2.msra.mxu0 0.0
    %118 = vmatprep.subr.mxu0 0.0
    %119 = vmatpush2.msra.mxu0 0.0
    %120 = vmatprep.subr.mxu0 0.0
    %121 = vmatpush2.msra.mxu0 0.0
    %122 = vmatprep.subr.mxu0 0.0
    %123 = vmatpush2.msra.mxu0 0.0
    %124 = vmatprep.mubr.f32.mxu0 0.0
    %125 = vmatmul.mubr.f32.gmra.mxu0 %v58
    %v126 = vpop.f32.mrf.mxu0
    %v127 = vadd.f32 %v52, %v126
    %v128 = vpop.f32.mrf.mxu0
    %129 = vdwg.mxu0
    %131 = vset.pattern.permute.xlu0 0
    %132 = vperm.xlu0 %131, %v45
    %v133 = vpop.permute.xlu0 %132
    %v135 = vmul.f32 %v127, %v133
    %v136 = vld [vmem:[%s4] sm:$0xff]
    %v137 = vld [vmem:[%s4 + $0x8] sm:$0xff]
    %v138 = vld [vmem:[%s4 + $0x10] sm:$0xff]
    %v139 = vld [vmem:[%s4 + $0x18] sm:$0xff]
    %v140 = vld [vmem:[%s4 + $0x20] sm:$0xff]
    %v141 = vld [vmem:[%s4 + $0x28] sm:$0xff]
    %v142 = vld [vmem:[%s4 + $0x30] sm:$0xff]
    %v143 = vld [vmem:[%s4 + $0x38] sm:$0xff]
    %v144 = vld [vmem:[%s5] sm:$0x1]
    %v146 = vlaneseq
    %v147 = vshrl.u32 %v146, 7
    %v148 = vsub.s32 0, %v147
    %v149 = vrot.slane %v144, %v148
    %vm151 = vcmask 523264
    %v153 = vsel %vm151, %v135, 0
    %155 = vmatprep.subr.mxu0 0.0
    %156 = vmatpush1.msra.mxu0 0.0
    %157 = vmatprep.subr.mxu0 0.0
    %158 = vmatpush1.msra.mxu0 0.0
    %159 = vmatprep.subr.mxu0 0.0
    %160 = vmatpush1.msra.mxu0 0.0
    %161 = vmatprep.subr.mxu0 0.0
    %162 = vmatpush1.msra.mxu0 0.0
    %163 = vmatprep.subr.mxu0 0.0
    %164 = vmatpush1.msra.mxu0 0.0
    %165 = vmatprep.subr.mxu0 0.0
    %166 = vmatpush1.msra.mxu0 0.0
    %167 = vmatprep.subr.mxu0 0.0
    %168 = vmatpush1.msra.mxu0 0.0
    %169 = vmatprep.subr.mxu0 0.0
    %170 = vmatpush1.msra.mxu0 0.0
    %171 = vmatprep.subr.mxu0 0.0
    %172 = vmatpush1.msra.mxu0 %v143
    %173 = vmatprep.subr.mxu0 0.0
    %174 = vmatpush1.msra.mxu0 %v142
    %175 = vmatprep.subr.mxu0 0.0
    %176 = vmatpush1.msra.mxu0 %v141
    %177 = vmatprep.subr.mxu0 0.0
    %178 = vmatpush1.msra.mxu0 %v140
    %179 = vmatprep.subr.mxu0 0.0
    %180 = vmatpush1.msra.mxu0 %v139
    %181 = vmatprep.subr.mxu0 0.0
    %182 = vmatpush1.msra.mxu0 %v138
    %183 = vmatprep.subr.mxu0 0.0
    %184 = vmatpush1.msra.mxu0 %v137
    %185 = vmatprep.subr.mxu0 0.0
    %186 = vmatpush1.msra.mxu0 %v136
    %187 = vmatprep.subr.mxu0 0.0
    %188 = vmatpush2.msra.mxu0 0.0
    %189 = vmatprep.subr.mxu0 0.0
    %190 = vmatpush2.msra.mxu0 0.0
    %191 = vmatprep.subr.mxu0 0.0
    %192 = vmatpush2.msra.mxu0 0.0
    %193 = vmatprep.subr.mxu0 0.0
    %194 = vmatpush2.msra.mxu0 0.0
    %195 = vmatprep.subr.mxu0 0.0
    %196 = vmatpush2.msra.mxu0 0.0
    %197 = vmatprep.subr.mxu0 0.0
    %198 = vmatpush2.msra.mxu0 0.0
    %199 = vmatprep.subr.mxu0 0.0
    %200 = vmatpush2.msra.mxu0 0.0
    %201 = vmatprep.subr.mxu0 0.0
    %202 = vmatpush2.msra.mxu0 0.0
    %203 = vmatprep.subr.mxu0 0.0
    %204 = vmatpush2.msra.mxu0 0.0
    %205 = vmatprep.subr.mxu0 0.0
    %206 = vmatpush2.msra.mxu0 0.0
    %207 = vmatprep.subr.mxu0 0.0
    %208 = vmatpush2.msra.mxu0 0.0
    %209 = vmatprep.subr.mxu0 0.0
    %210 = vmatpush2.msra.mxu0 0.0
    %211 = vmatprep.subr.mxu0 0.0
    %212 = vmatpush2.msra.mxu0 0.0
    %213 = vmatprep.subr.mxu0 0.0
    %214 = vmatpush2.msra.mxu0 0.0
    %215 = vmatprep.subr.mxu0 0.0
    %216 = vmatpush2.msra.mxu0 0.0
    %217 = vmatprep.subr.mxu0 0.0
    %218 = vmatpush2.msra.mxu0 0.0
    %219 = vmatprep.mubr.f32.mxu0 0.0
    %220 = vmatmul.mubr.f32.gmra.mxu0 %v153
    %v221 = vpop.f32.mrf.mxu0
    %v222 = vadd.f32 %v149, %v221
    %v223 = vpop.f32.mrf.mxu0
    %224 = vdwg.mxu0
    %vm225 = vcmask 17408
    %226 = vst.msk [vmem:[#allocation2] sm:$0x3] %vm225, %v222
    // Predicated region
    $region26: #{tpu_custom_call.1} parent=1 // pred_check
      _
    $region27: #{tpu_custom_call.1} parent=1 // pred_check_branch
      %228 = sbr.rel (0) target = $region29
    $region28: #{tpu_custom_call.1} parent=1 // pred_region
      %s230 = ssub.s32 32, 32
      %231 = vsyncadd [#allocation3], %s230
      %s233 = sshll.u32 [#allocation2], 4
      %s234 = int_to_ptr.vmem [resolvable:$true] %s233
      %236 = dma.vmem_to_hbm [thread:$0]  %s234, 32, %s6, [#allocation3]
    $region29: #{tpu_custom_call.1} parent=1 // pred_fallthru
      _
    // Predicated region
    $region30: #{tpu_custom_call.1} parent=1 // pred_check
      _
    $region31: #{tpu_custom_call.1} parent=1 // pred_check_branch
      %238 = sbr.rel (0) target = $region33
    $region32: #{tpu_custom_call.1} parent=1 // pred_region
      %239 = dma.done [#allocation3], 32
    $region33: #{tpu_custom_call.1} parent=1 // pred_fallthru
      _
    %240 = vsyncpa [#allocation3], 1

</llo_original>
